<compile_context>
chip_gen: v5e
topology: v5e:2x2
jax: 0.10.0
libtpu: 0.0.40
codegen_flags: <defaults>
</compile_context>

<pallas_src>
import jax
import jax.numpy as jnp
from jax.experimental import pallas as pl
from jax.experimental.pallas import tpu as pltpu


def _round_up(v, m):
    return (v + m - 1) // m * m


def _bernoulli_head_kernel(x_ref, w_ref, b_ref,
                           logits_ref, probs_ref, mode_ref, ent_ref):
    # Fused Linear + Bernoulli distribution epilogue.
    #   logits  = x @ W + b                         (MXU, f32 accumulate)
    #   probs   = sigmoid(logits)                   (EUP)
    #   mode    = probs > 0.5                       (VPU)
    #   entropy = sum(softplus(l) - l*sigmoid(l))   (EUP + XLU row-sum)
    logits = jnp.dot(x_ref[...], w_ref[...], preferred_element_type=jnp.float32)
    logits = logits + b_ref[...]
    probs = jax.nn.sigmoid(logits)
    # Numerically stable softplus in f32: max(l,0) + log(1 + exp(-|l|)).
    softplus = jnp.maximum(logits, 0.0) + jnp.log(1.0 + jnp.exp(-jnp.abs(logits)))
    logits_ref[...] = logits
    probs_ref[...] = probs
    mode_ref[...] = (probs > 0.5).astype(jnp.float32)
    ent_ref[...] = (softplus - logits * probs).sum(axis=-1, keepdims=True)


def _pick_batch_tile(B_pad, K, itemsize):
    """Batch tile: large (amortize ~0.35us/grid-step), VMEM-guarded, and with
    >=2 grid steps for moderate batches so v7x's two TCs both run."""
    MAX_TB = 2048
    VMEM_BUDGET = 12 * 1024 * 1024   # conservative vs. v5e's 16 MiB scoped default
    TB = _round_up(min(MAX_TB, B_pad), 8)
    # Guardrail: the double-buffered x tile is the dominant per-step VMEM term.
    while TB > 8 and 2 * TB * K * itemsize > VMEM_BUDGET:
        TB = _round_up(max(TB // 2, 8), 8)
    # v7x megacore: split the "parallel" axis into >=2 steps for mid-size batches.
    if B_pad > 256 and pl.cdiv(B_pad, TB) < 2:
        TB = _round_up(pl.cdiv(B_pad, 2), 8)
    return TB


@jax.jit
def bernoulli_forward_parts(x, w_t, b):
    """Fused Linear + Bernoulli epilogue. x: [B,K], w_t: [K,N] (compute dtype),
    b: [1,N] f32. Returns (logits, probs, mode, entropy) with logits f32."""
    B, K = x.shape
    N = w_t.shape[1]
    compute_dtype = w_t.dtype

    # Pad batch only to a multiple of 8 (sublane); no round-up to the tile size.
    B_pad = _round_up(B, 8)
    x_c = x.astype(compute_dtype)
    if B_pad != B:
        x_c = jnp.pad(x_c, ((0, B_pad - B), (0, 0)))
    b_c = b.reshape(1, N).astype(jnp.float32)

    TB = _pick_batch_tile(B_pad, K, jnp.dtype(compute_dtype).itemsize)
    grid = (pl.cdiv(B_pad, TB),)

    out_shapes = (
        jax.ShapeDtypeStruct((B_pad, N), jnp.float32),   # logits
        jax.ShapeDtypeStruct((B_pad, N), jnp.float32),   # probs
        jax.ShapeDtypeStruct((B_pad, N), jnp.float32),   # mode
        jax.ShapeDtypeStruct((B_pad, 1), jnp.float32),   # entropy (row-sum)
    )
    cost = pl.CostEstimate(
        flops=2 * B_pad * K * N,
        transcendentals=3 * B_pad * N,
        bytes_accessed=(B_pad * K * jnp.dtype(compute_dtype).itemsize
                        + K * N * jnp.dtype(compute_dtype).itemsize
                        + N * 4
                        + 4 * (3 * B_pad * N + B_pad)),
    )

    logits, probs, mode, ent = pl.pallas_call(
        _bernoulli_head_kernel,
        out_shape=out_shapes,
        grid_spec=pltpu.PrefetchScalarGridSpec(
            num_scalar_prefetch=0,
            grid=grid,
            in_specs=[
                # Activations: tiled over batch.
                pl.BlockSpec((TB, K), lambda i: (i, 0)),
                # Weight / bias: grid-invariant index_map -> stay VMEM-resident
                # across grid steps (no re-DMA). (pl.Buffered(1) skipped: zero
                # benefit at these K and not worth compile risk.)
                pl.BlockSpec((K, N), lambda i: (0, 0)),
                pl.BlockSpec((1, N), lambda i: (0, 0)),
            ],
            out_specs=[
                pl.BlockSpec((TB, N), lambda i: (i, 0)),
                pl.BlockSpec((TB, N), lambda i: (i, 0)),
                pl.BlockSpec((TB, N), lambda i: (i, 0)),
                pl.BlockSpec((TB, 1), lambda i: (i, 0)),
            ],
        ),
        compiler_params=pltpu.CompilerParams(
            dimension_semantics=("parallel",),
        ),
        cost_estimate=cost,
    )(x_c, w_t, b_c)

    if B_pad != B:
        logits, probs, mode, ent = logits[:B], probs[:B], mode[:B], ent[:B]
    return logits, probs, mode, ent[:, 0]


class FixedBernoulli:
    """JAX mirror of the torch FixedBernoulli; fused-kernel results cached."""

    def __init__(self, logits, probs=None, mode=None, entropy=None):
        self.logits = logits
        self._probs = probs
        self._mode = mode
        self._entropy = entropy

    @property
    def probs(self):
        if self._probs is not None:
            return self._probs
        return jax.nn.sigmoid(self.logits)

    def mode(self):
        if self._mode is not None:
            return self._mode
        return (self.probs > 0.5).astype(jnp.float32)

    def entropy(self):
        if self._entropy is not None:
            return self._entropy
        sp = jax.nn.softplus(self.logits)
        return (sp - self.logits * jax.nn.sigmoid(self.logits)).sum(-1)

    def log_probs(self, actions):
        # Bernoulli log_prob in logits form: a*l - softplus(l); sum action dims.
        lp = actions * self.logits - jax.nn.softplus(self.logits)
        return lp.reshape(actions.shape[0], -1).sum(-1, keepdims=True)

    # TODO(synk): .sample() (torch.distributions.Bernoulli.sample) not implemented;
    # the module's forward() never samples, so it is out of scope for this kernel.


def bernoulli_forward(x, w_t, b):
    """Full forward of the Bernoulli module: Linear -> FixedBernoulli(logits)."""
    logits, probs, mode, ent = bernoulli_forward_parts(x, w_t, b)
    return FixedBernoulli(logits, probs=probs, mode=mode, entropy=ent)


def _orthogonal(key, rows, cols, gain):
    """Deterministic orthogonal init (nn.init.orthogonal_ semantics)."""
    n = max(rows, cols)
    a = jax.random.normal(key, (n, n), dtype=jnp.float32)
    q, r = jnp.linalg.qr(a)
    q = q * jnp.sign(jnp.diag(r))
    return gain * q[:rows, :cols]


def init_bernoulli_params(key, num_inputs, num_outputs, gain=0.01,
                          param_dtype=jnp.bfloat16):
    # PyTorch Linear weight is (num_outputs, num_inputs); store transposed (K, N)
    # already in the kernel's compute dtype so nothing is cast/padded per forward.
    w = _orthogonal(key, num_outputs, num_inputs, gain)
    w_t = w.T.astype(param_dtype)
    b = jnp.zeros((1, num_outputs), jnp.float32)
    return w_t, b


if __name__ == "__main__":
    key = jax.random.PRNGKey(0)
    k_x, k_p = jax.random.split(key)

    batch = 8
    num_inputs = 32
    num_outputs = 6

    x = jax.random.normal(k_x, (batch, num_inputs), dtype=jnp.float32)
    w_t, b = init_bernoulli_params(k_p, num_inputs, num_outputs, gain=0.01)

    dist = bernoulli_forward(x, w_t, b)
    logits = jax.block_until_ready(dist.logits)

    # Reference in plain JAX with the same bf16 inputs and f32 accumulation.
    x_ref = x.astype(jnp.bfloat16).astype(jnp.float32)
    w_ref = w_t.astype(jnp.float32)
    ref_logits = x_ref @ w_ref + b
    assert logits.shape == (batch, num_outputs)
    assert jnp.allclose(logits, ref_logits, atol=1e-4, rtol=1e-4)

    ref_probs = jax.nn.sigmoid(ref_logits)
    assert jnp.allclose(dist.probs, ref_probs, atol=1e-4)

    mode = dist.mode()
    # sigmoid(l) > 0.5  <=>  l > 0 (checked against the kernel's own logits to
    # avoid boundary flips from sub-1e-6 numeric differences).
    assert jnp.allclose(mode, (logits > 0.0).astype(jnp.float32))

    ent = jax.block_until_ready(dist.entropy())
    ref_ent = (jax.nn.softplus(ref_logits)
               - ref_logits * jax.nn.sigmoid(ref_logits)).sum(-1)
    assert ent.shape == (batch,)
    assert jnp.allclose(ent, ref_ent, atol=1e-4)

    lp = jax.block_until_ready(dist.log_probs(mode))
    assert lp.shape == (batch, 1)

    print("KERNEL_OK")
</pallas_src>

<mosaic_0001>
module attributes {stable_mosaic.version = 11 : i64} {
  func.func @_bernoulli_head_kernel(%arg0: i32, %arg1: memref<8x32xbf16, #tpu.memory_space<vmem>>, %arg2: memref<32x6xbf16, #tpu.memory_space<vmem>>, %arg3: memref<1x6xf32, #tpu.memory_space<vmem>>, %arg4: memref<8x6xf32, #tpu.memory_space<vmem>>, %arg5: memref<8x6xf32, #tpu.memory_space<vmem>>, %arg6: memref<8x6xf32, #tpu.memory_space<vmem>>, %arg7: memref<8x1xf32, #tpu.memory_space<vmem>>) attributes {dimension_semantics = [#tpu.dimension_semantics<parallel>], iteration_bounds = array<i64: 1>, scalar_prefetch = 0 : i64, scratch_operands = 0 : i64, tpu.core_type = #tpu.core_type<tc>, window_params = [{transform_indices = @transform_0, window_bounds = array<i64: 8, 32>}, {pipeline_mode = #tpu.pipeline_mode<synchronous>, transform_indices = @transform_1, window_bounds = array<i64: 32, 6>}, {pipeline_mode = #tpu.pipeline_mode<synchronous>, transform_indices = @transform_2, window_bounds = array<i64: 1, 6>}, {transform_indices = @transform_3, window_bounds = array<i64: 8, 6>}, {transform_indices = @transform_4, window_bounds = array<i64: 8, 6>}, {transform_indices = @transform_5, window_bounds = array<i64: 8, 6>}, {transform_indices = @transform_6, window_bounds = array<i64: 8, 1>}]} {
    %c0 = arith.constant 0 : index
    %c0_0 = arith.constant 0 : index
    %0 = vector.load %arg1[%c0, %c0_0] : memref<8x32xbf16, #tpu.memory_space<vmem>>, vector<8x32xbf16>
    %c0_1 = arith.constant 0 : index
    %c0_2 = arith.constant 0 : index
    %1 = vector.load %arg2[%c0_1, %c0_2] : memref<32x6xbf16, #tpu.memory_space<vmem>>, vector<32x6xbf16>
    %cst = arith.constant dense<0.000000e+00> : vector<8x6xf32>
    %2 = tpu.matmul %0, %1, %cst {dimension_numbers = #tpu.dot_dimension_numbers<[1], [0], [0], [1], [0, 0, 1, 1], [], []>} : vector<8x32xbf16>, vector<32x6xbf16>, vector<8x6xf32> -> vector<8x6xf32>
    %c0_3 = arith.constant 0 : index
    %c0_4 = arith.constant 0 : index
    %3 = vector.load %arg3[%c0_3, %c0_4] : memref<1x6xf32, #tpu.memory_space<vmem>>, vector<1x6xf32>
    %4 = vector.broadcast %3 : vector<1x6xf32> to vector<8x6xf32>
    %5 = arith.addf %2, %4 : vector<8x6xf32>
    %6 = arith.negf %5 : vector<8x6xf32>
    %7 = math.exp %6 : vector<8x6xf32>
    %cst_5 = arith.constant 1.000000e+00 : f32
    %8 = vector.broadcast %cst_5 : f32 to vector<8x6xf32>
    %9 = arith.addf %8, %7 : vector<8x6xf32>
    %10 = arith.divf %8, %9 : vector<8x6xf32>
    %cst_6 = arith.constant 0.000000e+00 : f32
    %11 = vector.broadcast %cst_6 : f32 to vector<8x6xf32>
    %12 = arith.maximumf %5, %11 : vector<8x6xf32>
    %13 = math.absf %5 : vector<8x6xf32>
    %cst_7 = arith.constant 0.000000e+00 : f32
    %14 = vector.broadcast %cst_7 : f32 to vector<8x6xf32>
    %15 = arith.subf %14, %13 : vector<8x6xf32>
    %16 = math.exp %15 : vector<8x6xf32>
    %cst_8 = arith.constant 1.000000e+00 : f32
    %17 = vector.broadcast %cst_8 : f32 to vector<8x6xf32>
    %18 = arith.addf %17, %16 : vector<8x6xf32>
    %19 = math.log %18 : vector<8x6xf32>
    %20 = arith.addf %12, %19 : vector<8x6xf32>
    %c0_9 = arith.constant 0 : index
    %c0_10 = arith.constant 0 : index
    %21 = vector.load %arg4[%c0_9, %c0_10] : memref<8x6xf32, #tpu.memory_space<vmem>>, vector<8x6xf32>
    tpu.vector_store %arg4[%c0_9, %c0_10], %5 {strides = array<i32>} : memref<8x6xf32, #tpu.memory_space<vmem>>, vector<8x6xf32>,
    %c0_11 = arith.constant 0 : index
    %c0_12 = arith.constant 0 : index
    %22 = vector.load %arg5[%c0_11, %c0_12] : memref<8x6xf32, #tpu.memory_space<vmem>>, vector<8x6xf32>
    tpu.vector_store %arg5[%c0_11, %c0_12], %10 {strides = array<i32>} : memref<8x6xf32, #tpu.memory_space<vmem>>, vector<8x6xf32>,
    %cst_13 = arith.constant 5.000000e-01 : f32
    %23 = vector.broadcast %cst_13 : f32 to vector<8x6xf32>
    %24 = arith.cmpf ogt, %10, %23 : vector<8x6xf32>
    %25 = arith.extui %24 : vector<8x6xi1> to vector<8x6xi32>
    %26 = arith.sitofp %25 : vector<8x6xi32> to vector<8x6xf32>
    %c0_14 = arith.constant 0 : index
    %c0_15 = arith.constant 0 : index
    %27 = vector.load %arg6[%c0_14, %c0_15] : memref<8x6xf32, #tpu.memory_space<vmem>>, vector<8x6xf32>
    tpu.vector_store %arg6[%c0_14, %c0_15], %26 {strides = array<i32>} : memref<8x6xf32, #tpu.memory_space<vmem>>, vector<8x6xf32>,
    %28 = arith.mulf %5, %10 : vector<8x6xf32>
    %29 = arith.subf %20, %28 : vector<8x6xf32>
    %cst_16 = arith.constant dense<0.000000e+00> : vector<8xf32>
    %30 = vector.multi_reduction <add>, %29, %cst_16 [1] : vector<8x6xf32> to vector<8xf32>
    %31 = vector.shape_cast %30 : vector<8xf32> to vector<8x1xf32>
    %c0_17 = arith.constant 0 : index
    %c0_18 = arith.constant 0 : index
    %32 = vector.load %arg7[%c0_17, %c0_18] : memref<8x1xf32, #tpu.memory_space<vmem>>, vector<8x1xf32>
    tpu.vector_store %arg7[%c0_17, %c0_18], %31 {strides = array<i32>} : memref<8x1xf32, #tpu.memory_space<vmem>>, vector<8x1xf32>,
    return
  }
  func.func @transform_0(%arg0: i32) -> (i32, i32) {
    %c0_i32 = arith.constant 0 : i32
    %c0_i32_0 = arith.constant 0 : i32
    return %arg0, %c0_i32 : i32, i32
  }
  func.func @transform_1(%arg0: i32) -> (i32, i32) {
    %c0_i32 = arith.constant 0 : i32
    %c0_i32_0 = arith.constant 0 : i32
    %c0_i32_1 = arith.constant 0 : i32
    return %c0_i32, %c0_i32_0 : i32, i32
  }
  func.func @transform_2(%arg0: i32) -> (i32, i32) {
    %c0_i32 = arith.constant 0 : i32
    %c0_i32_0 = arith.constant 0 : i32
    %c0_i32_1 = arith.constant 0 : i32
    return %c0_i32, %c0_i32_0 : i32, i32
  }
  func.func @transform_3(%arg0: i32) -> (i32, i32) {
    %c0_i32 = arith.constant 0 : i32
    %c0_i32_0 = arith.constant 0 : i32
    return %arg0, %c0_i32 : i32, i32
  }
  func.func @transform_4(%arg0: i32) -> (i32, i32) {
    %c0_i32 = arith.constant 0 : i32
    %c0_i32_0 = arith.constant 0 : i32
    return %arg0, %c0_i32 : i32, i32
  }
  func.func @transform_5(%arg0: i32) -> (i32, i32) {
    %c0_i32 = arith.constant 0 : i32
    %c0_i32_0 = arith.constant 0 : i32
    return %arg0, %c0_i32 : i32, i32
  }
  func.func @transform_6(%arg0: i32) -> (i32, i32) {
    %c0_i32 = arith.constant 0 : i32
    %c0_i32_0 = arith.constant 0 : i32
    return %arg0, %c0_i32 : i32, i32
  }
}

</mosaic_0001>

<llo_original>
// kernel: bernoulli_forward_parts.1
$region0: #{bernoulli_forward_parts.1}
  #allocation0 [shape = 'u32[]', space=smem, size = 0x4, offset = 0x4, fixed_abs, tag = 'smem constant byte address 0x4 - core index']
  #allocation1 [shape = 'u32[72,128]{1,0:T(1,128)}', space=vmem, size = 0x9000, scoped, tag = 'internal scratch']
  %s0 = inlined_call_operand.vmem [shape: bf16[8,32], index: 0, kind: input, shape index: {}]
  %s1 = inlined_call_operand.vmem [shape: bf16[32,6], index: 1, kind: input, shape index: {}]
  %s2 = inlined_call_operand.vmem [shape: f32[1,6], index: 2, kind: input, shape index: {}]
  %s3 = inlined_call_operand.hbm [shape: f32[8,6], index: 3, kind: output, shape index: {0}]
  %s4 = inlined_call_operand.hbm [shape: f32[8,6], index: 4, kind: output, shape index: {1}]
  %s5 = inlined_call_operand.hbm [shape: f32[8,6], index: 5, kind: output, shape index: {2}]
  %s6 = inlined_call_operand.vmem [shape: f32[8,1], index: 6, kind: output, shape index: {3}]
  %7 = xla_tuple %s3, %s4, %s5, %s6
  %s8 = sld [smem:[#allocation0]]
  $region46: #{bernoulli_forward_parts.1} parent=0
    _
  %s10 = ssub.s32 1, %s8
  %s11 = scalar_select 0, %s10, %s8
  $region1: #{bernoulli_forward_parts.1} parent=0
    #allocation2 [shape = 'u8[4096]{0}', space=vmem, size = 0x1000, scoped, tag = 'output window, operand 0, single buffered']
    #allocation3 [shape = 's32[1]{0}', space=sflag, size = 0x4, scoped, tag = 'scoped memory for bernoulli_forward_parts.1']
    #allocation4 [shape = 'u8[4096]{0}', space=vmem, size = 0x1000, scoped, tag = 'output window, operand 1, single buffered']
    #allocation5 [shape = 's32[1]{0}', space=sflag, size = 0x4, scoped, tag = 'scoped memory for bernoulli_forward_parts.1']
    #allocation6 [shape = 'u8[4096]{0}', space=vmem, size = 0x1000, scoped, tag = 'output window, operand 2, single buffered']
    %12 = vsyncpa [#allocation3], 0
    %13 = vsyncpa [#allocation5], 0
    // Predicated region
    $region2: #{bernoulli_forward_parts.1} parent=1 // pred_check
      _
    $region3: #{bernoulli_forward_parts.1} parent=1 // pred_check_branch
      %15 = sbr.rel (0) target = $region5
    $region4: #{bernoulli_forward_parts.1} parent=1 // pred_region
      _
    $region5: #{bernoulli_forward_parts.1} parent=1 // pred_fallthru
      _
    // Predicated region
    $region6: #{bernoulli_forward_parts.1} parent=1 // pred_check
      _
    $region7: #{bernoulli_forward_parts.1} parent=1 // pred_check_branch
      %17 = sbr.rel (0) target = $region9
    $region8: #{bernoulli_forward_parts.1} parent=1 // pred_region
      _
    $region9: #{bernoulli_forward_parts.1} parent=1 // pred_fallthru
      _
    // Predicated region
    $region10: #{bernoulli_forward_parts.1} parent=1 // pred_check
      _
    $region11: #{bernoulli_forward_parts.1} parent=1 // pred_check_branch
      %19 = sbr.rel (0) target = $region13
    $region12: #{bernoulli_forward_parts.1} parent=1 // pred_region
      _
    $region13: #{bernoulli_forward_parts.1} parent=1 // pred_fallthru
      _
    %v21 = vld [vmem:[%s0] sm:$0xf]
    %v22 = vld [vmem:[%s1] sm:$0xf]
    %v23 = vld [vmem:[%s1 + $0x4] sm:$0xf]
    %v24 = vld [vmem:[%s1 + $0x8] sm:$0xf]
    %v25 = vld [vmem:[%s1 + $0xc] sm:$0xf]
    %v26 = vld [vmem:[%s2] sm:$0x1]
    %v28 = vperm.slane %v26, 0
    %v34 = vunpack.c.l.b16 %v22
    %v35 = vunpack.c.l.b16 %v23
    %v36 = vunpack.c.l.b16 %v24
    %v37 = vunpack.c.l.b16 %v25
    %v38 = vpack.c.b16 %v35, %v34
    %v39 = vpack.c.b16 %v37, %v36
    %vm42 = vcmask 261120
    %v44 = vsel %vm42, %v21, 0
    %46 = vmatpush.bf16.msra.mxu0 0
    %47 = vmatpush.bf16.msra.mxu0 0
    %48 = vmatpush.bf16.msra.mxu0 0
    %49 = vmatpush.bf16.msra.mxu0 0
    %50 = vmatpush.bf16.msra.mxu0 0
    %51 = vmatpush.bf16.msra.mxu0 0
    %52 = vmatpush.bf16.msra.mxu0 %v39
    %53 = vmatpush.bf16.msra.mxu0 %v38
    %54 = vmatmul.bf16.gmra.mxu0 %v44
    %v55 = vpop.f32.mrf.mxu0
    %v56 = vadd.f32 %v28, %v55
    %v57 = vpop.f32.mrf.mxu0
    %58 = vdwg.mxu0
    %v59 = vxor.u32 %v56, 2147483648
    %v60 = vmul.f32 %v59, 1.442695
    %v61 = vpow.pop %v60
    %v62 = vadd.f32 %v61, 1.0
    %v63 = vrcp.pop %v62
    %v64 = vmul.f32 %v62, %v63
    %v65 = vsub.f32 1.0, %v64
    %v66 = vmul.f32 %v63, %v65
    %v67 = vadd.f32 %v63, %v66
    %vm68 = vweird.f32 %v62
    %vm69 = vweird.f32 %v63
    %vm70 = vmor %vm68, %vm69
    %v71 = vsel %vm70, %v63, %v67
    %v72 = vand.u32 2147483647, %v62
    %vm73 = vcmp.eq.f32.partialorder %v72, 8.507059e+37
    %v74 = vand.u32 %v62, 2147483648
    %v75 = vor.u32 1.1754944e-38, %v74
    %v76 = vsel %vm73, %v75, %v71
    %v77 = vmul.f32 1.0, %v76
    %v78 = vmax.f32 %v56, 0.0
    %v79 = vand.u32 2147483647, %v56
    %v80 = vsub.f32 0.0, %v79
    %v81 = vmul.f32 %v80, 1.442695
    %v82 = vpow.pop %v81
    %v83 = vadd.f32 %v82, 1.0
    %v84 = vlog2.pop %v83
    %v85 = vmul.f32 %v84, 0.6931472
    %v86 = vadd.f32 %v78, %v85
    %vm87 = vcmask 48128
    %88 = vst.msk [vmem:[#allocation2] sm:$0xff] %vm87, %v56
    %89 = vst.msk [vmem:[#allocation4] sm:$0xff] %vm87, %v77
    %vm90 = vcmp.gt.f32.partialorder %v77, 0.5
    %v91 = vsel %vm90, 1, 0
    %v92 = vcvt.s32.f32 %v91
    %93 = vst.msk [vmem:[#allocation6] sm:$0xff] %vm87, %v92
    %v94 = vmul.f32 %v56, %v77
    %v95 = vsub.f32 %v86, %v94
    %v96 = vsel %vm87, %v95, 0.0
    %97 = vadd.xlane.f32.xlu0 %v96
    %v98 = vpop.xlane.xlu0 %97
    %vm99 = vcmask 7168
    %100 = vst.msk [vmem:[%s6] sm:$0xff] %vm99, %v98
    // Predicated region
    $region14: #{bernoulli_forward_parts.1} parent=1 // pred_check
      _
    $region15: #{bernoulli_forward_parts.1} parent=1 // pred_check_branch
      %102 = sbr.rel (0) target = $region17
    $region16: #{bernoulli_forward_parts.1} parent=1 // pred_region
      %104 = vsyncadd [#allocation3], 0
      %s106 = sshll.u32 [#allocation2], 4
      %s107 = int_to_ptr.vmem [resolvable:$true] %s106
      %s108 = sshll.u32 %s3, 4
      %s109 = int_to_ptr.hbm [resolvable:$true] %s108
      %111 = dma.vmem_to_hbm [thread:$0]  %s107, 128, %s109, [#allocation3]
    $region17: #{bernoulli_forward_parts.1} parent=1 // pred_fallthru
      _
    // Predicated region
    $region18: #{bernoulli_forward_parts.1} parent=1 // pred_check
      _
    $region19: #{bernoulli_forward_parts.1} parent=1 // pred_check_branch
      %113 = sbr.rel (0) target = $region21
    $region20: #{bernoulli_forward_parts.1} parent=1 // pred_region
      %115 = vsyncadd [#allocation5], 0
      %s117 = sshll.u32 [#allocation4], 4
      %s118 = int_to_ptr.vmem [resolvable:$true] %s117
      %s119 = sshll.u32 %s4, 4
      %s120 = int_to_ptr.hbm [resolvable:$true] %s119
      %122 = dma.vmem_to_hbm [thread:$0]  %s118, 128, %s120, [#allocation5]
    $region21: #{bernoulli_forward_parts.1} parent=1 // pred_fallthru
      _
    // Predicated region
    $region22: #{bernoulli_forward_parts.1} parent=1 // pred_check
      _
    $region23: #{bernoulli_forward_parts.1} parent=1 // pred_check_branch
      %124 = sbr.rel (0) target = $region25
    $region24: #{bernoulli_forward_parts.1} parent=1 // pred_region
      %126 = vsyncadd [#allocation5], 0
      %s128 = sshll.u32 [#allocation6], 4
      %s129 = int_to_ptr.vmem [resolvable:$true] %s128
      %s130 = sshll.u32 %s5, 4
      %s131 = int_to_ptr.hbm [resolvable:$true] %s130
      %133 = dma.vmem_to_hbm [thread:$0]  %s129, 128, %s131, [#allocation5]
    $region25: #{bernoulli_forward_parts.1} parent=1 // pred_fallthru
      _
    // Predicated region
    $region26: #{bernoulli_forward_parts.1} parent=1 // pred_check
      _
    $region27: #{bernoulli_forward_parts.1} parent=1 // pred_check_branch
      %135 = sbr.rel (0) target = $region29
    $region28: #{bernoulli_forward_parts.1} parent=1 // pred_region
      _
    $region29: #{bernoulli_forward_parts.1} parent=1 // pred_fallthru
      _
    // Predicated region
    $region30: #{bernoulli_forward_parts.1} parent=1 // pred_check
      _
    $region31: #{bernoulli_forward_parts.1} parent=1 // pred_check_branch
      %137 = sbr.rel (0) target = $region33
    $region32: #{bernoulli_forward_parts.1} parent=1 // pred_region
      %139 = dma.done [#allocation3], 128
    $region33: #{bernoulli_forward_parts.1} parent=1 // pred_fallthru
      _
    // Predicated region
    $region34: #{bernoulli_forward_parts.1} parent=1 // pred_check
      _
    $region35: #{bernoulli_forward_parts.1} parent=1 // pred_check_branch
      %141 = sbr.rel (0) target = $region37
    $region36: #{bernoulli_forward_parts.1} parent=1 // pred_region
      %143 = dma.done [#allocation5], 128
    $region37: #{bernoulli_forward_parts.1} parent=1 // pred_fallthru
      _
    // Predicated region
    $region38: #{bernoulli_forward_parts.1} parent=1 // pred_check
      _
    $region39: #{bernoulli_forward_parts.1} parent=1 // pred_check_branch
      %145 = sbr.rel (0) target = $region41
    $region40: #{bernoulli_forward_parts.1} parent=1 // pred_region
      %147 = dma.done [#allocation5], 128
    $region41: #{bernoulli_forward_parts.1} parent=1 // pred_fallthru
      _
    // Predicated region
    $region42: #{bernoulli_forward_parts.1} parent=1 // pred_check
      _
    $region43: #{bernoulli_forward_parts.1} parent=1 // pred_check_branch
      %149 = sbr.rel (0) target = $region45
    $region44: #{bernoulli_forward_parts.1} parent=1 // pred_region
      _
    $region45: #{bernoulli_forward_parts.1} parent=1 // pred_fallthru
      _
    %150 = vsyncpa [#allocation3], 1
    %151 = vsyncpa [#allocation5], 1

</llo_original>
